<compile_context>
chip_gen: v7x
topology: tpu7x:2x2x1
jax: 0.10.0
libtpu: 0.0.40
codegen_flags: <defaults>
</compile_context>

<pallas_src>
import jax
import jax.numpy as jnp
from jax import lax
from jax.experimental import pallas as pl
from jax.experimental.pallas import tpu as pltpu


def gru_recurrent_kernel(gi_ref, h0_ref, whh_ref, bhn_ref, out_ref, h_scratch):
    """Serial (recurrent) part of the GRU. One grid step == TT timesteps.

    gi_ref   : (TT, B, 3H) precomputed x_t @ W_ih^T + b_ih + [b_hr, b_hz, 0]  (streamed)
    h0_ref   : (1, B, H)   initial hidden state (resident block)
    whh_ref  : (H, 3H)     transposed hidden weights (resident)
    bhn_ref  : (1, H)      b_hn (only hidden bias that cannot be folded out)
    out_ref  : (TT, B, H)  output slab for this block of timesteps
    h_scratch: (B, H) f32  VMEM accumulator carrying h across grid steps
    """
    blk = pl.program_id(0)

    @pl.when(blk == 0)
    def _():
        h_scratch[...] = h0_ref[0].astype(jnp.float32)

    H = h_scratch.shape[-1]
    TT = gi_ref.shape[0]
    b_hn = bhn_ref[...].astype(jnp.float32)                       # (1, H)
    w_hh = whh_ref[...]                                           # (H, 3H), resident

    def step(i, h):
        gi = gi_ref[i].astype(jnp.float32)                        # (B, 3H)
        gh = jnp.dot(h.astype(w_hh.dtype), w_hh,
                     preferred_element_type=jnp.float32)          # (B, 3H)
        r = jax.nn.sigmoid(gi[:, :H] + gh[:, :H])
        z = jax.nn.sigmoid(gi[:, H:2 * H] + gh[:, H:2 * H])
        n = jnp.tanh(gi[:, 2 * H:] + r * (gh[:, 2 * H:] + b_hn))
        h_new = (1.0 - z) * n + z * h
        out_ref[i] = h_new.astype(out_ref.dtype)
        return h_new

    # Short, fixed trip-count loop: fully unrolled for LLO scheduler visibility.
    h_final = lax.fori_loop(0, TT, step, h_scratch[...], unroll=True)
    h_scratch[...] = h_final


def simple_encoder_forward(tokens, embedding, w_ih, w_hh, b_ih, b_hh, h_0=None,
                           *, timestep_block=32, matmul_dtype=jnp.float32):
    """Equivalent of SimpleEncoder.forward(input, h_0) -> (outputs, h_n)."""
    T, B = tokens.shape
    E = embedding.shape[1]
    H = w_hh.shape[1]

    # Embedding lookup: glue (pure gather), done in plain JAX.
    embedded = jnp.take(embedding, tokens, axis=0).astype(jnp.float32)  # (T, B, E)

    if h_0 is None:
        h_0 = jnp.zeros((1, B, H), jnp.float32)
    h_0 = h_0.astype(jnp.float32)

    # ---- Input projection hoisted out of the recurrence: one big MXU matmul. ----
    wih_t = w_ih.T.astype(jnp.float32)                                   # (E, 3H)
    # Fold b_ih and the r/z parts of b_hh into the precomputed gates; only b_hn
    # must stay inside the recurrence because of r * (W_hn h + b_hn).
    bias_fold = (b_ih + jnp.concatenate(
        [b_hh[:2 * H], jnp.zeros((H,), b_hh.dtype)])).astype(jnp.float32)
    gi_all = jnp.einsum('tbe,eg->tbg', embedded, wih_t) + bias_fold      # (T, B, 3H)

    # Recurrent-path operands (optionally bf16 weights for v6e/v7x MXU).
    whh_t = w_hh.T.astype(matmul_dtype)                                  # (H, 3H)
    bhn = b_hh[2 * H:].astype(jnp.float32).reshape(1, H)                 # (1, H)

    # Block TT timesteps per grid step to amortize per-grid-step overhead.
    TT = int(max(1, min(timestep_block, T)))
    n_blocks = pl.cdiv(T, TT)
    T_pad = n_blocks * TT
    if T_pad != T:
        gi_all = jnp.pad(gi_all, ((0, T_pad - T), (0, 0), (0, 0)))

    # TODO(synk): for production shapes, pad B to a multiple of 8 and H/E to
    # multiples of 128, and on v7x add a leading 'parallel' batch grid axis to
    # shard the recurrence across the two TensorCores.
    outputs = pl.pallas_call(
        gru_recurrent_kernel,
        out_shape=jax.ShapeDtypeStruct((T_pad, B, H), jnp.float32),
        grid_spec=pltpu.PrefetchScalarGridSpec(
            num_scalar_prefetch=0,
            grid=(n_blocks,),
            in_specs=[
                pl.BlockSpec((TT, B, 3 * H), lambda i: (i, 0, 0)),  # gi slab (streamed)
                pl.BlockSpec((1, B, H), lambda i: (0, 0, 0)),       # h_0 (resident)
                pl.BlockSpec((H, 3 * H), lambda i: (0, 0)),         # W_hh^T (resident)
                pl.BlockSpec((1, H), lambda i: (0, 0)),             # b_hn (resident)
            ],
            out_specs=pl.BlockSpec((TT, B, H), lambda i: (i, 0, 0)),
            scratch_shapes=[pltpu.VMEM((B, H), jnp.float32)],
        ),
        compiler_params=pltpu.CompilerParams(
            dimension_semantics=("arbitrary",)),  # time is a true recurrence
    )(gi_all, h_0, whh_t, bhn)

    outputs = outputs[:T]
    # Single layer, unidirectional: final hidden state == last output row.
    h_n = outputs[T - 1][None]
    return outputs, h_n


def _gru_reference(embedded, h0, w_ih, w_hh, b_ih, b_hh):
    """Pure-JAX reference (PyTorch nn.GRU semantics) for the correctness check."""
    H = w_hh.shape[1]

    def step(h, x):
        gi = x @ w_ih.T + b_ih
        gh = h @ w_hh.T + b_hh
        r = jax.nn.sigmoid(gi[:, :H] + gh[:, :H])
        z = jax.nn.sigmoid(gi[:, H:2 * H] + gh[:, H:2 * H])
        n = jnp.tanh(gi[:, 2 * H:] + r * gh[:, 2 * H:])
        h_new = (1.0 - z) * n + z * h
        return h_new, h_new

    h_last, outs = lax.scan(step, h0[0], embedded)
    return outs, h_last[None]


if __name__ == "__main__":
    # Small deterministic setup consistent with the module's __init__:
    # embed = nn.Embedding(vocab, embed_size); rnn = GRU(embed_size, hidden_size).
    vocab_size = 20
    T, B = 10, 2         # seq_len, batch (T chosen non-multiple of TT to exercise padding)
    E, H = 32, 32        # embed_size, hidden_size

    key = jax.random.PRNGKey(0)
    k_emb, k_wih, k_whh, k_bih, k_bhh, k_tok, k_h0 = jax.random.split(key, 7)

    embedding = jax.random.normal(k_emb, (vocab_size, E), jnp.float32) * 0.1
    w_ih = jax.random.normal(k_wih, (3 * H, E), jnp.float32) * 0.1
    w_hh = jax.random.normal(k_whh, (3 * H, H), jnp.float32) * 0.1
    b_ih = jax.random.normal(k_bih, (3 * H,), jnp.float32) * 0.1
    b_hh = jax.random.normal(k_bhh, (3 * H,), jnp.float32) * 0.1

    tokens = jax.random.randint(k_tok, (T, B), 0, vocab_size, jnp.int32)
    h_0 = jax.random.normal(k_h0, (1, B, H), jnp.float32) * 0.1

    # timestep_block=4 -> grid=(3,) so the hidden-state carry across grid steps
    # and the tail padding are both exercised.
    outputs, h_n = simple_encoder_forward(tokens, embedding, w_ih, w_hh,
                                          b_ih, b_hh, h_0, timestep_block=4)
    outputs = jax.block_until_ready(outputs)
    h_n = jax.block_until_ready(h_n)

    # Sanity check against a pure-JAX reference.
    embedded = jnp.take(embedding, tokens, axis=0)
    ref_out, ref_hn = _gru_reference(embedded, h_0, w_ih, w_hh, b_ih, b_hh)
    assert outputs.shape == (T, B, H)
    assert h_n.shape == (1, B, H)
    assert jnp.allclose(outputs, ref_out, atol=1e-5, rtol=1e-5)
    assert jnp.allclose(h_n, ref_hn, atol=1e-5, rtol=1e-5)

    print("KERNEL_OK")
</pallas_src>

<mosaic_0001>
module attributes {stable_mosaic.version = 11 : i64} {
  func.func @gru_recurrent_kernel(%arg0: i32, %arg1: memref<4x2x96xf32, #tpu.memory_space<vmem>>, %arg2: memref<1x2x32xf32, #tpu.memory_space<vmem>>, %arg3: memref<32x96xf32, #tpu.memory_space<vmem>>, %arg4: memref<1x32xf32, #tpu.memory_space<vmem>>, %arg5: memref<4x2x32xf32, #tpu.memory_space<vmem>>, %arg6: memref<2x32xf32, #tpu.memory_space<vmem>>) attributes {dimension_semantics = [#tpu.dimension_semantics<arbitrary>], iteration_bounds = array<i64: 3>, scalar_prefetch = 0 : i64, scratch_operands = 1 : i64, tpu.core_type = #tpu.core_type<tc>, window_params = [{transform_indices = @transform_0, window_bounds = array<i64: 4, 2, 96>}, {pipeline_mode = #tpu.pipeline_mode<synchronous>, transform_indices = @transform_1, window_bounds = array<i64: 1, 2, 32>}, {pipeline_mode = #tpu.pipeline_mode<synchronous>, transform_indices = @transform_2, window_bounds = array<i64: 32, 96>}, {pipeline_mode = #tpu.pipeline_mode<synchronous>, transform_indices = @transform_3, window_bounds = array<i64: 1, 32>}, {transform_indices = @transform_4, window_bounds = array<i64: 4, 2, 32>}]} {
    %c0_i32 = arith.constant 0 : i32
    %0 = arith.cmpi eq, %arg0, %c0_i32 : i32
    %1 = arith.extui %0 : i1 to i32
    %c0_i32_0 = arith.constant 0 : i32
    %2 = arith.cmpi ne, %1, %c0_i32_0 : i32
    scf.if %2 {
      %c0_40 = arith.constant 0 : index
      %c0_41 = arith.constant 0 : index
      %c0_42 = arith.constant 0 : index
      %151 = vector.load %arg2[%c0_40, %c0_41, %c0_42] : memref<1x2x32xf32, #tpu.memory_space<vmem>>, vector<1x2x32xf32>
      %152 = vector.shape_cast %151 : vector<1x2x32xf32> to vector<2x32xf32>
      %c0_43 = arith.constant 0 : index
      %c0_44 = arith.constant 0 : index
      %153 = vector.load %arg6[%c0_43, %c0_44] : memref<2x32xf32, #tpu.memory_space<vmem>>, vector<2x32xf32>
      tpu.vector_store %arg6[%c0_43, %c0_44], %152 {strides = array<i32>} : memref<2x32xf32, #tpu.memory_space<vmem>>, vector<2x32xf32>,
    } else {
    }
    %c0 = arith.constant 0 : index
    %c0_1 = arith.constant 0 : index
    %3 = vector.load %arg4[%c0, %c0_1] : memref<1x32xf32, #tpu.memory_space<vmem>>, vector<1x32xf32>
    %c0_2 = arith.constant 0 : index
    %c0_3 = arith.constant 0 : index
    %4 = vector.load %arg3[%c0_2, %c0_3] : memref<32x96xf32, #tpu.memory_space<vmem>>, vector<32x96xf32>
    %c0_4 = arith.constant 0 : index
    %c0_5 = arith.constant 0 : index
    %5 = vector.load %arg6[%c0_4, %c0_5] : memref<2x32xf32, #tpu.memory_space<vmem>>, vector<2x32xf32>
    %c0_i32_6 = arith.constant 0 : i32
    %6 = arith.index_cast %c0_i32_6 : i32 to index
    %c0_7 = arith.constant 0 : index
    %c0_8 = arith.constant 0 : index
    %7 = vector.load %arg1[%6, %c0_7, %c0_8] : memref<4x2x96xf32, #tpu.memory_space<vmem>>, vector<1x2x96xf32>
    %8 = vector.shape_cast %7 : vector<1x2x96xf32> to vector<2x96xf32>
    %cst = arith.constant dense<0.000000e+00> : vector<2x96xf32>
    %9 = tpu.matmul %5, %4, %cst {dimension_numbers = #tpu.dot_dimension_numbers<[1], [0], [0], [1], [0, 0, 1, 1], [], []>} : vector<2x32xf32>, vector<32x96xf32>, vector<2x96xf32> -> vector<2x96xf32>
    %10 = vector.extract_strided_slice %8 {offsets = [0, 0], sizes = [2, 32], strides = [1, 1]} : vector<2x96xf32> to vector<2x32xf32>
    %11 = vector.extract_strided_slice %9 {offsets = [0, 0], sizes = [2, 32], strides = [1, 1]} : vector<2x96xf32> to vector<2x32xf32>
    %12 = arith.addf %10, %11 : vector<2x32xf32>
    %13 = arith.negf %12 : vector<2x32xf32>
    %14 = math.exp %13 : vector<2x32xf32>
    %cst_9 = arith.constant 1.000000e+00 : f32
    %15 = vector.broadcast %cst_9 : f32 to vector<2x32xf32>
    %16 = arith.addf %15, %14 : vector<2x32xf32>
    %17 = arith.divf %15, %16 : vector<2x32xf32>
    %18 = vector.extract_strided_slice %8 {offsets = [0, 32], sizes = [2, 32], strides = [1, 1]} : vector<2x96xf32> to vector<2x32xf32>
    %19 = vector.extract_strided_slice %9 {offsets = [0, 32], sizes = [2, 32], strides = [1, 1]} : vector<2x96xf32> to vector<2x32xf32>
    %20 = arith.addf %18, %19 : vector<2x32xf32>
    %21 = arith.negf %20 : vector<2x32xf32>
    %22 = math.exp %21 : vector<2x32xf32>
    %cst_10 = arith.constant 1.000000e+00 : f32
    %23 = vector.broadcast %cst_10 : f32 to vector<2x32xf32>
    %24 = arith.addf %23, %22 : vector<2x32xf32>
    %25 = arith.divf %23, %24 : vector<2x32xf32>
    %26 = vector.extract_strided_slice %8 {offsets = [0, 64], sizes = [2, 32], strides = [1, 1]} : vector<2x96xf32> to vector<2x32xf32>
    %27 = vector.extract_strided_slice %9 {offsets = [0, 64], sizes = [2, 32], strides = [1, 1]} : vector<2x96xf32> to vector<2x32xf32>
    %28 = vector.broadcast %3 : vector<1x32xf32> to vector<2x32xf32>
    %29 = arith.addf %27, %28 : vector<2x32xf32>
    %30 = arith.mulf %17, %29 : vector<2x32xf32>
    %31 = arith.addf %26, %30 : vector<2x32xf32>
    %32 = math.tanh %31 : vector<2x32xf32>
    %cst_11 = arith.constant 1.000000e+00 : f32
    %33 = vector.broadcast %cst_11 : f32 to vector<2x32xf32>
    %34 = arith.subf %33, %25 : vector<2x32xf32>
    %35 = arith.mulf %34, %32 : vector<2x32xf32>
    %36 = arith.mulf %25, %5 : vector<2x32xf32>
    %37 = arith.addf %35, %36 : vector<2x32xf32>
    %38 = arith.index_cast %c0_i32_6 : i32 to index
    %c0_12 = arith.constant 0 : index
    %c0_13 = arith.constant 0 : index
    %39 = vector.load %arg5[%38, %c0_12, %c0_13] : memref<4x2x32xf32, #tpu.memory_space<vmem>>, vector<1x2x32xf32>
    %40 = vector.shape_cast %39 : vector<1x2x32xf32> to vector<2x32xf32>
    %41 = vector.shape_cast %37 : vector<2x32xf32> to vector<1x2x32xf32>
    tpu.vector_store %arg5[%38, %c0_12, %c0_13], %41 {strides = array<i32>} : memref<4x2x32xf32, #tpu.memory_space<vmem>>, vector<1x2x32xf32>,
    %c1_i32 = arith.constant 1 : i32
    %42 = arith.index_cast %c1_i32 : i32 to index
    %c0_14 = arith.constant 0 : index
    %c0_15 = arith.constant 0 : index
    %43 = vector.load %arg1[%42, %c0_14, %c0_15] : memref<4x2x96xf32, #tpu.memory_space<vmem>>, vector<1x2x96xf32>
    %44 = vector.shape_cast %43 : vector<1x2x96xf32> to vector<2x96xf32>
    %cst_16 = arith.constant dense<0.000000e+00> : vector<2x96xf32>
    %45 = tpu.matmul %37, %4, %cst_16 {dimension_numbers = #tpu.dot_dimension_numbers<[1], [0], [0], [1], [0, 0, 1, 1], [], []>} : vector<2x32xf32>, vector<32x96xf32>, vector<2x96xf32> -> vector<2x96xf32>
    %46 = vector.extract_strided_slice %44 {offsets = [0, 0], sizes = [2, 32], strides = [1, 1]} : vector<2x96xf32> to vector<2x32xf32>
    %47 = vector.extract_strided_slice %45 {offsets = [0, 0], sizes = [2, 32], strides = [1, 1]} : vector<2x96xf32> to vector<2x32xf32>
    %48 = arith.addf %46, %47 : vector<2x32xf32>
    %49 = arith.negf %48 : vector<2x32xf32>
    %50 = math.exp %49 : vector<2x32xf32>
    %cst_17 = arith.constant 1.000000e+00 : f32
    %51 = vector.broadcast %cst_17 : f32 to vector<2x32xf32>
    %52 = arith.addf %51, %50 : vector<2x32xf32>
    %53 = arith.divf %51, %52 : vector<2x32xf32>
    %54 = vector.extract_strided_slice %44 {offsets = [0, 32], sizes = [2, 32], strides = [1, 1]} : vector<2x96xf32> to vector<2x32xf32>
    %55 = vector.extract_strided_slice %45 {offsets = [0, 32], sizes = [2, 32], strides = [1, 1]} : vector<2x96xf32> to vector<2x32xf32>
    %56 = arith.addf %54, %55 : vector<2x32xf32>
    %57 = arith.negf %56 : vector<2x32xf32>
    %58 = math.exp %57 : vector<2x32xf32>
    %cst_18 = arith.constant 1.000000e+00 : f32
    %59 = vector.broadcast %cst_18 : f32 to vector<2x32xf32>
    %60 = arith.addf %59, %58 : vector<2x32xf32>
    %61 = arith.divf %59, %60 : vector<2x32xf32>
    %62 = vector.extract_strided_slice %44 {offsets = [0, 64], sizes = [2, 32], strides = [1, 1]} : vector<2x96xf32> to vector<2x32xf32>
    %63 = vector.extract_strided_slice %45 {offsets = [0, 64], sizes = [2, 32], strides = [1, 1]} : vector<2x96xf32> to vector<2x32xf32>
    %64 = vector.broadcast %3 : vector<1x32xf32> to vector<2x32xf32>
    %65 = arith.addf %63, %64 : vector<2x32xf32>
    %66 = arith.mulf %53, %65 : vector<2x32xf32>
    %67 = arith.addf %62, %66 : vector<2x32xf32>
    %68 = math.tanh %67 : vector<2x32xf32>
    %cst_19 = arith.constant 1.000000e+00 : f32
    %69 = vector.broadcast %cst_19 : f32 to vector<2x32xf32>
    %70 = arith.subf %69, %61 : vector<2x32xf32>
    %71 = arith.mulf %70, %68 : vector<2x32xf32>
    %72 = arith.mulf %61, %37 : vector<2x32xf32>
    %73 = arith.addf %71, %72 : vector<2x32xf32>
    %74 = arith.index_cast %c1_i32 : i32 to index
    %c0_20 = arith.constant 0 : index
    %c0_21 = arith.constant 0 : index
    %75 = vector.load %arg5[%74, %c0_20, %c0_21] : memref<4x2x32xf32, #tpu.memory_space<vmem>>, vector<1x2x32xf32>
    %76 = vector.shape_cast %75 : vector<1x2x32xf32> to vector<2x32xf32>
    %77 = vector.shape_cast %73 : vector<2x32xf32> to vector<1x2x32xf32>
    tpu.vector_store %arg5[%74, %c0_20, %c0_21], %77 {strides = array<i32>} : memref<4x2x32xf32, #tpu.memory_space<vmem>>, vector<1x2x32xf32>,
    %c2_i32 = arith.constant 2 : i32
    %78 = arith.index_cast %c2_i32 : i32 to index
    %c0_22 = arith.constant 0 : index
    %c0_23 = arith.constant 0 : index
    %79 = vector.load %arg1[%78, %c0_22, %c0_23] : memref<4x2x96xf32, #tpu.memory_space<vmem>>, vector<1x2x96xf32>
    %80 = vector.shape_cast %79 : vector<1x2x96xf32> to vector<2x96xf32>
    %cst_24 = arith.constant dense<0.000000e+00> : vector<2x96xf32>
    %81 = tpu.matmul %73, %4, %cst_24 {dimension_numbers = #tpu.dot_dimension_numbers<[1], [0], [0], [1], [0, 0, 1, 1], [], []>} : vector<2x32xf32>, vector<32x96xf32>, vector<2x96xf32> -> vector<2x96xf32>
    %82 = vector.extract_strided_slice %80 {offsets = [0, 0], sizes = [2, 32], strides = [1, 1]} : vector<2x96xf32> to vector<2x32xf32>
    %83 = vector.extract_strided_slice %81 {offsets = [0, 0], sizes = [2, 32], strides = [1, 1]} : vector<2x96xf32> to vector<2x32xf32>
    %84 = arith.addf %82, %83 : vector<2x32xf32>
    %85 = arith.negf %84 : vector<2x32xf32>
    %86 = math.exp %85 : vector<2x32xf32>
    %cst_25 = arith.constant 1.000000e+00 : f32
    %87 = vector.broadcast %cst_25 : f32 to vector<2x32xf32>
    %88 = arith.addf %87, %86 : vector<2x32xf32>
    %89 = arith.divf %87, %88 : vector<2x32xf32>
    %90 = vector.extract_strided_slice %80 {offsets = [0, 32], sizes = [2, 32], strides = [1, 1]} : vector<2x96xf32> to vector<2x32xf32>
    %91 = vector.extract_strided_slice %81 {offsets = [0, 32], sizes = [2, 32], strides = [1, 1]} : vector<2x96xf32> to vector<2x32xf32>
    %92 = arith.addf %90, %91 : vector<2x32xf32>
    %93 = arith.negf %92 : vector<2x32xf32>
    %94 = math.exp %93 : vector<2x32xf32>
    %cst_26 = arith.constant 1.000000e+00 : f32
    %95 = vector.broadcast %cst_26 : f32 to vector<2x32xf32>
    %96 = arith.addf %95, %94 : vector<2x32xf32>
    %97 = arith.divf %95, %96 : vector<2x32xf32>
    %98 = vector.extract_strided_slice %80 {offsets = [0, 64], sizes = [2, 32], strides = [1, 1]} : vector<2x96xf32> to vector<2x32xf32>
    %99 = vector.extract_strided_slice %81 {offsets = [0, 64], sizes = [2, 32], strides = [1, 1]} : vector<2x96xf32> to vector<2x32xf32>
    %100 = vector.broadcast %3 : vector<1x32xf32> to vector<2x32xf32>
    %101 = arith.addf %99, %100 : vector<2x32xf32>
    %102 = arith.mulf %89, %101 : vector<2x32xf32>
    %103 = arith.addf %98, %102 : vector<2x32xf32>
    %104 = math.tanh %103 : vector<2x32xf32>
    %cst_27 = arith.constant 1.000000e+00 : f32
    %105 = vector.broadcast %cst_27 : f32 to vector<2x32xf32>
    %106 = arith.subf %105, %97 : vector<2x32xf32>
    %107 = arith.mulf %106, %104 : vector<2x32xf32>
    %108 = arith.mulf %97, %73 : vector<2x32xf32>
    %109 = arith.addf %107, %108 : vector<2x32xf32>
    %110 = arith.index_cast %c2_i32 : i32 to index
    %c0_28 = arith.constant 0 : index
    %c0_29 = arith.constant 0 : index
    %111 = vector.load %arg5[%110, %c0_28, %c0_29] : memref<4x2x32xf32, #tpu.memory_space<vmem>>, vector<1x2x32xf32>
    %112 = vector.shape_cast %111 : vector<1x2x32xf32> to vector<2x32xf32>
    %113 = vector.shape_cast %109 : vector<2x32xf32> to vector<1x2x32xf32>
    tpu.vector_store %arg5[%110, %c0_28, %c0_29], %113 {strides = array<i32>} : memref<4x2x32xf32, #tpu.memory_space<vmem>>, vector<1x2x32xf32>,
    %c3_i32 = arith.constant 3 : i32
    %114 = arith.index_cast %c3_i32 : i32 to index
    %c0_30 = arith.constant 0 : index
    %c0_31 = arith.constant 0 : index
    %115 = vector.load %arg1[%114, %c0_30, %c0_31] : memref<4x2x96xf32, #tpu.memory_space<vmem>>, vector<1x2x96xf32>
    %116 = vector.shape_cast %115 : vector<1x2x96xf32> to vector<2x96xf32>
    %cst_32 = arith.constant dense<0.000000e+00> : vector<2x96xf32>
    %117 = tpu.matmul %109, %4, %cst_32 {dimension_numbers = #tpu.dot_dimension_numbers<[1], [0], [0], [1], [0, 0, 1, 1], [], []>} : vector<2x32xf32>, vector<32x96xf32>, vector<2x96xf32> -> vector<2x96xf32>
    %118 = vector.extract_strided_slice %116 {offsets = [0, 0], sizes = [2, 32], strides = [1, 1]} : vector<2x96xf32> to vector<2x32xf32>
    %119 = vector.extract_strided_slice %117 {offsets = [0, 0], sizes = [2, 32], strides = [1, 1]} : vector<2x96xf32> to vector<2x32xf32>
    %120 = arith.addf %118, %119 : vector<2x32xf32>
    %121 = arith.negf %120 : vector<2x32xf32>
    %122 = math.exp %121 : vector<2x32xf32>
    %cst_33 = arith.constant 1.000000e+00 : f32
    %123 = vector.broadcast %cst_33 : f32 to vector<2x32xf32>
    %124 = arith.addf %123, %122 : vector<2x32xf32>
    %125 = arith.divf %123, %124 : vector<2x32xf32>
    %126 = vector.extract_strided_slice %116 {offsets = [0, 32], sizes = [2, 32], strides = [1, 1]} : vector<2x96xf32> to vector<2x32xf32>
    %127 = vector.extract_strided_slice %117 {offsets = [0, 32], sizes = [2, 32], strides = [1, 1]} : vector<2x96xf32> to vector<2x32xf32>
    %128 = arith.addf %126, %127 : vector<2x32xf32>
    %129 = arith.negf %128 : vector<2x32xf32>
    %130 = math.exp %129 : vector<2x32xf32>
    %cst_34 = arith.constant 1.000000e+00 : f32
    %131 = vector.broadcast %cst_34 : f32 to vector<2x32xf32>
    %132 = arith.addf %131, %130 : vector<2x32xf32>
    %133 = arith.divf %131, %132 : vector<2x32xf32>
    %134 = vector.extract_strided_slice %116 {offsets = [0, 64], sizes = [2, 32], strides = [1, 1]} : vector<2x96xf32> to vector<2x32xf32>
    %135 = vector.extract_strided_slice %117 {offsets = [0, 64], sizes = [2, 32], strides = [1, 1]} : vector<2x96xf32> to vector<2x32xf32>
    %136 = vector.broadcast %3 : vector<1x32xf32> to vector<2x32xf32>
    %137 = arith.addf %135, %136 : vector<2x32xf32>
    %138 = arith.mulf %125, %137 : vector<2x32xf32>
    %139 = arith.addf %134, %138 : vector<2x32xf32>
    %140 = math.tanh %139 : vector<2x32xf32>
    %cst_35 = arith.constant 1.000000e+00 : f32
    %141 = vector.broadcast %cst_35 : f32 to vector<2x32xf32>
    %142 = arith.subf %141, %133 : vector<2x32xf32>
    %143 = arith.mulf %142, %140 : vector<2x32xf32>
    %144 = arith.mulf %133, %109 : vector<2x32xf32>
    %145 = arith.addf %143, %144 : vector<2x32xf32>
    %146 = arith.index_cast %c3_i32 : i32 to index
    %c0_36 = arith.constant 0 : index
    %c0_37 = arith.constant 0 : index
    %147 = vector.load %arg5[%146, %c0_36, %c0_37] : memref<4x2x32xf32, #tpu.memory_space<vmem>>, vector<1x2x32xf32>
    %148 = vector.shape_cast %147 : vector<1x2x32xf32> to vector<2x32xf32>
    %149 = vector.shape_cast %145 : vector<2x32xf32> to vector<1x2x32xf32>
    tpu.vector_store %arg5[%146, %c0_36, %c0_37], %149 {strides = array<i32>} : memref<4x2x32xf32, #tpu.memory_space<vmem>>, vector<1x2x32xf32>,
    %c4_i32 = arith.constant 4 : i32
    %c0_38 = arith.constant 0 : index
    %c0_39 = arith.constant 0 : index
    %150 = vector.load %arg6[%c0_38, %c0_39] : memref<2x32xf32, #tpu.memory_space<vmem>>, vector<2x32xf32>
    tpu.vector_store %arg6[%c0_38, %c0_39], %145 {strides = array<i32>} : memref<2x32xf32, #tpu.memory_space<vmem>>, vector<2x32xf32>,
    return
  }
  func.func @transform_0(%arg0: i32) -> (i32, i32, i32) {
    %c0_i32 = arith.constant 0 : i32
    %c0_i32_0 = arith.constant 0 : i32
    %c0_i32_1 = arith.constant 0 : i32
    return %arg0, %c0_i32, %c0_i32_0 : i32, i32, i32
  }
  func.func @transform_1(%arg0: i32) -> (i32, i32, i32) {
    %c0_i32 = arith.constant 0 : i32
    %c0_i32_0 = arith.constant 0 : i32
    %c0_i32_1 = arith.constant 0 : i32
    %c0_i32_2 = arith.constant 0 : i32
    return %c0_i32, %c0_i32_0, %c0_i32_1 : i32, i32, i32
  }
  func.func @transform_2(%arg0: i32) -> (i32, i32) {
    %c0_i32 = arith.constant 0 : i32
    %c0_i32_0 = arith.constant 0 : i32
    %c0_i32_1 = arith.constant 0 : i32
    return %c0_i32, %c0_i32_0 : i32, i32
  }
  func.func @transform_3(%arg0: i32) -> (i32, i32) {
    %c0_i32 = arith.constant 0 : i32
    %c0_i32_0 = arith.constant 0 : i32
    %c0_i32_1 = arith.constant 0 : i32
    return %c0_i32, %c0_i32_0 : i32, i32
  }
  func.func @transform_4(%arg0: i32) -> (i32, i32, i32) {
    %c0_i32 = arith.constant 0 : i32
    %c0_i32_0 = arith.constant 0 : i32
    %c0_i32_1 = arith.constant 0 : i32
    return %arg0, %c0_i32, %c0_i32_0 : i32, i32, i32
  }
}

</mosaic_0001>

<llo_original>
// kernel: tpu_custom_call.1
$region0: #{tpu_custom_call.1}
  #allocation0 [shape = 'u32[]', space=smem, size = 0x4, offset = 0x4, fixed_abs, tag = 'smem constant byte address 0x4 - core index']
  #allocation1 [shape = 'u32[144,128]{1,0:T(1,128)}', space=vmem, size = 0x12000, scoped, tag = 'internal scratch']
  #allocation2 [shape = 'f32[2,32]{1,0:T(2,128)}', space=vmem, size = 0x400, scoped, tag = 'scratch operand']
  %s0 = inlined_call_operand.hbm [shape: f32[12,2,96], index: 0, kind: input, shape index: {}]
  %s1 = inlined_call_operand.vmem [shape: f32[1,2,32], index: 1, kind: input, shape index: {}]
  %s2 = inlined_call_operand.hbm [shape: f32[32,96], index: 2, kind: input, shape index: {}]
  %s3 = inlined_call_operand.vmem [shape: f32[1,32], index: 3, kind: input, shape index: {}]
  %s4 = inlined_call_operand.hbm [shape: f32[12,2,32], index: 4, kind: output, shape index: {}]
  %s5 = sld [smem:[#allocation0]]
  $region61: #{tpu_custom_call.1} parent=0
    _
  %s7 = ssub.s32 1, %s5
  %s8 = scalar_select 0, %s7, %s5
  $region1: #{tpu_custom_call.1} parent=0
    #allocation3 [shape = 'u8[8192]{0}', space=vmem, size = 0x2000, scoped, tag = 'input window, operand 0']
    #allocation4 [shape = 's32[2]{0}', space=sflag, size = 0x8, scoped, tag = 'scoped memory for tpu_custom_call.1']
    #allocation5 [shape = 's32[2]{0}', space=sflag, size = 0x8, scoped, tag = 'scoped memory for tpu_custom_call.1']
    #allocation6 [shape = 'u8[16384]{0}', space=vmem, size = 0x4000, scoped, tag = 'input window, operand 2, single buffered']
    #allocation7 [shape = 's32[1]{0}', space=sflag, size = 0x4, scoped, tag = 'scoped memory for tpu_custom_call.1']
    #allocation8 [shape = 'u8[8192]{0}', space=vmem, size = 0x2000, scoped, tag = 'output window, operand 0']
    %9 = vsyncpa [#allocation4], 0
    %s10 = scalar_lea.sflag [#allocation4], 1
    %11 = vsyncpa %s10, 0
    %12 = vsyncpa [#allocation7], 0
    %13 = vsyncpa [#allocation5], 0
    %s14 = scalar_lea.sflag [#allocation5], 1
    %15 = vsyncpa %s14, 0
    loop: start=0, step=1, limit=5
    $region2: #{tpu_custom_call.1} parent=1 // loop_pre_header
      _
    $region3: #{tpu_custom_call.1} parent=1 // loop_header
      %s17 = sphi 0, %s21
      %p18 = scmp.ge.s32.totalorder %s17, 5
      %s27 = sphi 0, %s29
      %s30 = sphi 0, %s27
      %s31 = sphi 0, %s30
      %s47 = sphi 0, %s31
      %s51 = sphi 0, %s51
      %s53 = sphi 0, %s51
      %s54 = sphi 0, %s53
      %s68 = sphi 0, %s54
      %s72 = sphi 0, %s72
      %s74 = sphi 0, %s72
      %s75 = sphi 0, %s74
      %s89 = sphi 0, %s75
      %s93 = sphi 0, %s93
      %s95 = sphi 0, %s93
      %s96 = sphi 0, %s95
      %s110 = sphi 0, %s96
      %s116 = sphi 0, %s118
      %s119 = sphi 0, %s116
      %s120 = sphi 0, %s119
      %s136 = sphi 0, %s120
    $region4: #{tpu_custom_call.1} parent=1 // loop_header_branch
      %20 = sbr.rel (%p18) target = $region8
    $region5: #{tpu_custom_call.1} parent=1 // loop_body
      %s22 = ssub.s32 %s17, 1
      %s23 = ssub.s32 %s17, 2
      %s24 = sadd.s32 %s17, 1
      %s25 = ssub.s32 %s17, %s24
      %p26 = scmp.eq.s32.totalorder %s25, 0
      %s28 = sadd.s32 %s27, 1
      %s29 = scalar_select %p26, %s27, %s28
      %p32 = pneg %p26
      %p33 = scmp.eq.s32.totalorder %s17, 2
      %p34 = por %p32, %p33
      %p35 = scmp.ne.s32.totalorder %s27, %s30
      %p36 = scmp.eq.s32.totalorder %s17, 0
      %p37 = por %p35, %p36
      %p38 = scmp.ne.s32.totalorder %s27, %s30
      %p39 = scmp.eq.s32.totalorder %s22, 2
      %p40 = por %p38, %p39
      %p41 = scmp.ne.s32.totalorder %s30, %s31
      %p42 = scmp.eq.s32.totalorder %s22, 0
      %p43 = por %p41, %p42
      %p44 = scmp.ne.s32.totalorder %s30, %s31
      %p45 = scmp.eq.s32.totalorder %s23, 2
      %p46 = por %p44, %p45
      %p48 = scmp.ne.s32.totalorder %s31, %s47
      %p49 = scmp.eq.s32.totalorder %s23, 0
      %p50 = por %p48, %p49
      %s52 = sadd.s32 %s51, 1
      %p55 = scmp.eq.s32.totalorder %s17, 2
      %p56 = scmp.ne.s32.totalorder %s51, %s53
      %p57 = scmp.eq.s32.totalorder %s17, 0
      %p58 = por %p56, %p57
      %p59 = scmp.ne.s32.totalorder %s51, %s53
      %p60 = scmp.eq.s32.totalorder %s22, 2
      %p61 = por %p59, %p60
      %p62 = scmp.ne.s32.totalorder %s53, %s54
      %p63 = scmp.eq.s32.totalorder %s22, 0
      %p64 = por %p62, %p63
      %p65 = scmp.ne.s32.totalorder %s53, %s54
      %p66 = scmp.eq.s32.totalorder %s23, 2
      %p67 = por %p65, %p66
      %p69 = scmp.ne.s32.totalorder %s54, %s68
      %p70 = scmp.eq.s32.totalorder %s23, 0
      %p71 = por %p69, %p70
      %s73 = sadd.s32 %s72, 1
      %p76 = scmp.eq.s32.totalorder %s17, 2
      %p77 = scmp.ne.s32.totalorder %s72, %s74
      %p78 = scmp.eq.s32.totalorder %s17, 0
      %p79 = por %p77, %p78
      %p80 = scmp.ne.s32.totalorder %s72, %s74
      %p81 = scmp.eq.s32.totalorder %s22, 2
      %p82 = por %p80, %p81
      %p83 = scmp.ne.s32.totalorder %s74, %s75
      %p84 = scmp.eq.s32.totalorder %s22, 0
      %p85 = por %p83, %p84
      %p86 = scmp.ne.s32.totalorder %s74, %s75
      %p87 = scmp.eq.s32.totalorder %s23, 2
      %p88 = por %p86, %p87
      %p90 = scmp.ne.s32.totalorder %s75, %s89
      %p91 = scmp.eq.s32.totalorder %s23, 0
      %p92 = por %p90, %p91
      %s94 = sadd.s32 %s93, 1
      %p97 = scmp.eq.s32.totalorder %s17, 2
      %p98 = scmp.ne.s32.totalorder %s93, %s95
      %p99 = scmp.eq.s32.totalorder %s17, 0
      %p100 = por %p98, %p99
      %p101 = scmp.ne.s32.totalorder %s93, %s95
      %p102 = scmp.eq.s32.totalorder %s22, 2
      %p103 = por %p101, %p102
      %p104 = scmp.ne.s32.totalorder %s95, %s96
      %p105 = scmp.eq.s32.totalorder %s22, 0
      %p106 = por %p104, %p105
      %p107 = scmp.ne.s32.totalorder %s95, %s96
      %p108 = scmp.eq.s32.totalorder %s23, 2
      %p109 = por %p107, %p108
      %p111 = scmp.ne.s32.totalorder %s96, %s110
      %p112 = scmp.eq.s32.totalorder %s23, 0
      %p113 = por %p111, %p112
      %s114 = ssub.s32 %s17, %s24
      %p115 = scmp.eq.s32.totalorder %s114, 0
      %s117 = sadd.s32 %s116, 1
      %s118 = scalar_select %p115, %s116, %s117
      %p121 = pneg %p115
      %p122 = scmp.eq.s32.totalorder %s17, 2
      %p123 = por %p121, %p122
      %p124 = scmp.ne.s32.totalorder %s116, %s119
      %p125 = scmp.eq.s32.totalorder %s17, 0
      %p126 = por %p124, %p125
      %p127 = scmp.ne.s32.totalorder %s116, %s119
      %p128 = scmp.eq.s32.totalorder %s22, 2
      %p129 = por %p127, %p128
      %p130 = scmp.ne.s32.totalorder %s119, %s120
      %p131 = scmp.eq.s32.totalorder %s22, 0
      %p132 = por %p130, %p131
      %p133 = scmp.ne.s32.totalorder %s119, %s120
      %p134 = scmp.eq.s32.totalorder %s23, 2
      %p135 = por %p133, %p134
      %p137 = scmp.ne.s32.totalorder %s120, %s136
      %p138 = scmp.eq.s32.totalorder %s23, 0
      %p139 = por %p137, %p138
      %p140 = scmp.le.s32.totalorder 1, %s17
      %p141 = scmp.lt.s32.totalorder %s17, 4
      %p142 = pnand %p140, %p141
      %p143 = pneg %p142
      // Predicated region
      $region9: #{tpu_custom_call.1} parent=5 // pred_check
        _
      $region10: #{tpu_custom_call.1} parent=5 // pred_check_branch
        %145 = sbr.rel (%p142) target = $region12
      $region11: #{tpu_custom_call.1} parent=5 // pred_region
        %s146 = ssub.s32 %s17, 1
        // Predicated region
        $region13: #{tpu_custom_call.1} parent=11 // pred_check
          %p147 = pneg %p64
        $region14: #{tpu_custom_call.1} parent=11 // pred_check_branch
          %149 = sbr.rel (%p147) target = $region16
        $region15: #{tpu_custom_call.1} parent=11 // pred_region
          _
        $region16: #{tpu_custom_call.1} parent=11 // pred_fallthru
          _
        // Predicated region
        $region17: #{tpu_custom_call.1} parent=11 // pred_check
          %p150 = pneg %p85
        $region18: #{tpu_custom_call.1} parent=11 // pred_check_branch
          %152 = sbr.rel (%p150) target = $region20
        $region19: #{tpu_custom_call.1} parent=11 // pred_region
          %s154 = ssub.s32 512, 512
          %155 = vsyncadd [#allocation7], %s154
          %s156 = sshll.u32 [#allocation6], 4
          %s157 = int_to_ptr.vmem [resolvable:$true] %s156
          %162 = dma.hbm_to_vmem [thread:$0]  %s2, 512, %s157, [#allocation7], 128, 128, 8
        $region20: #{tpu_custom_call.1} parent=11 // pred_fallthru
          _
        // Predicated region
        $region21: #{tpu_custom_call.1} parent=11 // pred_check
          %p163 = pneg %p106
        $region22: #{tpu_custom_call.1} parent=11 // pred_check_branch
          %165 = sbr.rel (%p163) target = $region24
        $region23: #{tpu_custom_call.1} parent=11 // pred_region
          _
        $region24: #{tpu_custom_call.1} parent=11 // pred_fallthru
          _
      $region12: #{tpu_custom_call.1} parent=5 // pred_fallthru
        _
      %p166 = scmp.lt.s32.totalorder %s17, 3
      // Predicated region
      $region25: #{tpu_custom_call.1} parent=5 // pred_check
        %p167 = pneg %p166
      $region26: #{tpu_custom_call.1} parent=5 // pred_check_branch
        %169 = sbr.rel (%p167) target = $region28
      $region27: #{tpu_custom_call.1} parent=5 // pred_region
        // Predicated region
        $region29: #{tpu_custom_call.1} parent=27 // pred_check
          %p170 = pneg %p37
        $region30: #{tpu_custom_call.1} parent=27 // pred_check_branch
          %172 = sbr.rel (%p170) target = $region32
        $region31: #{tpu_custom_call.1} parent=27 // pred_region
          %s173 = sand.u32 %s27, 1
          %s174 = scalar_lea.sflag [#allocation4], %s173
          %s175 = sand.u32 %s27, 1
          %s176 = smul.addr %s175, 8
          %s177 = scalar_lea.vmem [#allocation3], %s176
          %s178 = smul.u32 4, %s17
          %s180 = ssub.s32 128, 128
          %181 = vsyncadd %s174, %s180
          %s182 = smul.addr %s178, 32
          %s183 = scalar_lea.hbm %s0, %s182
          %s184 = sshll.u32 %s177, 4
          %s185 = int_to_ptr.vmem [resolvable:$true] %s184
          %190 = dma.hbm_to_vmem [thread:$0]  %s183, 128, %s185, %s174, 32, 32, 2
        $region32: #{tpu_custom_call.1} parent=27 // pred_fallthru
          _
      $region28: #{tpu_custom_call.1} parent=5 // pred_fallthru
        _
      %p191 = scmp.le.s32.totalorder 1, %s17
      %p192 = scmp.lt.s32.totalorder %s17, 4
      %p193 = pnand %p191, %p192
      %p194 = pneg %p193
      // Predicated region
      $region33: #{tpu_custom_call.1} parent=5 // pred_check
        _
      $region34: #{tpu_custom_call.1} parent=5 // pred_check_branch
        %196 = sbr.rel (%p193) target = $region36
      $region35: #{tpu_custom_call.1} parent=5 // pred_region
        %s197 = ssub.s32 %s17, 1
        %s198 = sand.u32 %s30, 1
        %s199 = scalar_lea.sflag [#allocation4], %s198
        %s200 = sand.u32 %s30, 1
        %s201 = smul.addr %s200, 8
        %s202 = scalar_lea.vmem [#allocation3], %s201
        // Predicated region
        $region37: #{tpu_custom_call.1} parent=35 // pred_check
          %p203 = pneg %p43
        $region38: #{tpu_custom_call.1} parent=35 // pred_check_branch
          %205 = sbr.rel (%p203) target = $region40
        $region39: #{tpu_custom_call.1} parent=35 // pred_region
          %206 = dma.done %s199, 128
        $region40: #{tpu_custom_call.1} parent=35 // pred_fallthru
          _
        // Predicated region
        $region41: #{tpu_custom_call.1} parent=35 // pred_check
          %p207 = pneg %p85
        $region42: #{tpu_custom_call.1} parent=35 // pred_check_branch
          %209 = sbr.rel (%p207) target = $region44
        $region43: #{tpu_custom_call.1} parent=35 // pred_region
          %210 = dma.done [#allocation7], 512
        $region44: #{tpu_custom_call.1} parent=35 // pred_fallthru
          _
        %s211 = sand.u32 %s30, 1
        %s212 = scalar_lea.sflag [#allocation4], %s211
        %s213 = sand.u32 %s30, 1
        %s214 = smul.addr %s213, 8
        %s215 = scalar_lea.vmem [#allocation3], %s214
        %p216 = pneg %p43
        %p217 = pneg %p40
        %p218 = pneg %p64
        %p219 = pneg %p61
        %p220 = pneg %p85
        %p221 = pneg %p82
        %p222 = pneg %p106
        %p223 = pneg %p103
        %p224 = pneg %p132
        %p225 = pneg %p129
        %s226 = sand.u32 %s119, 1
        %s227 = scalar_lea.sflag [#allocation5], %s226
        %s228 = sand.u32 %s119, 1
        %s229 = smul.addr %s228, 8
        %s230 = scalar_lea.vmem [#allocation8], %s229
        %s231 = smul.u32 4, %s22
        %s232 = smul.u32 4, %s22
        %p233 = scmp.eq.s32.totalorder %s22, 0
        // Predicated region
        $region45: #{tpu_custom_call.1} parent=35 // pred_check
          %p234 = pneg %p233
        $region46: #{tpu_custom_call.1} parent=35 // pred_check_branch
          %236 = sbr.rel (%p234) target = $region48
        $region47: #{tpu_custom_call.1} parent=35 // pred_region
          %v237 = vld [vmem:[%s1] sm:$0x3]
          %vm238 = vcmask 254976
          %239 = vst.msk [vmem:[#allocation2] sm:$0x3] %vm238, %v237
        $region48: #{tpu_custom_call.1} parent=35 // pred_fallthru
          _
        %v240 = vld [vmem:[%s3] sm:$0x1]
        %v241 = vld [vmem:[#allocation6] sm:$0xff]
        %v242 = vld [vmem:[#allocation6 + $0x8] sm:$0xff]
        %v243 = vld [vmem:[#allocation6 + $0x10] sm:$0xff]
        %v244 = vld [vmem:[#allocation6 + $0x18] sm:$0xff]
        %v245 = vld [vmem:[#allocation2] sm:$0x3]
        %v246 = vld [vmem:[%s202] sm:$0x3]
        %vm247 = vcmask 261120
        %v249 = vsel %vm247, %v245, 0
        %251 = vmatprep.subr.mxu0 0.0
        %252 = vmatpush1.msra.mxu0 %v241
        %253 = vmatprep.subr.mxu0 0.0
        %254 = vmatpush1.msra.mxu0 %v242
        %255 = vmatprep.subr.mxu0 0.0
        %256 = vmatpush1.msra.mxu0 %v243
        %257 = vmatprep.subr.mxu0 0.0
        %258 = vmatpush1.msra.mxu0 %v244
        %259 = vmatprep.subr.mxu0 0.0
        %260 = vmatpush1.msra.mxu0 0.0
        %261 = vmatprep.subr.mxu0 0.0
        %262 = vmatpush1.msra.mxu0 0.0
        %263 = vmatprep.subr.mxu0 0.0
        %264 = vmatpush1.msra.mxu0 0.0
        %265 = vmatprep.subr.mxu0 0.0
        %266 = vmatpush1.msra.mxu0 0.0
        %267 = vmatprep.subr.mxu0 0.0
        %268 = vmatpush1.msra.mxu0 0.0
        %269 = vmatprep.subr.mxu0 0.0
        %270 = vmatpush1.msra.mxu0 0.0
        %271 = vmatprep.subr.mxu0 0.0
        %272 = vmatpush1.msra.mxu0 0.0
        %273 = vmatprep.subr.mxu0 0.0
        %274 = vmatpush1.msra.mxu0 0.0
        %275 = vmatprep.subr.mxu0 0.0
        %276 = vmatpush1.msra.mxu0 0.0
        %277 = vmatprep.subr.mxu0 0.0
        %278 = vmatpush1.msra.mxu0 0.0
        %279 = vmatprep.subr.mxu0 0.0
        %280 = vmatpush1.msra.mxu0 0.0
        %281 = vmatprep.subr.mxu0 0.0
        %282 = vmatpush1.msra.mxu0 0.0
        %283 = vmatprep.subr.mxu0 0.0
        %284 = vmatpush1.msra.mxu0 0.0
        %285 = vmatprep.subr.mxu0 0.0
        %286 = vmatpush1.msra.mxu0 0.0
        %287 = vmatprep.subr.mxu0 0.0
        %288 = vmatpush1.msra.mxu0 0.0
        %289 = vmatprep.subr.mxu0 0.0
        %290 = vmatpush1.msra.mxu0 0.0
        %291 = vmatprep.subr.mxu0 0.0
        %292 = vmatpush1.msra.mxu0 0.0
        %293 = vmatprep.subr.mxu0 0.0
        %294 = vmatpush1.msra.mxu0 0.0
        %295 = vmatprep.subr.mxu0 0.0
        %296 = vmatpush1.msra.mxu0 0.0
        %297 = vmatprep.subr.mxu0 0.0
        %298 = vmatpush1.msra.mxu0 0.0
        %299 = vmatprep.subr.mxu0 0.0
        %300 = vmatpush1.msra.mxu0 0.0
        %301 = vmatprep.subr.mxu0 0.0
        %302 = vmatpush1.msra.mxu0 0.0
        %303 = vmatprep.subr.mxu0 0.0
        %304 = vmatpush1.msra.mxu0 0.0
        %305 = vmatprep.subr.mxu0 0.0
        %306 = vmatpush1.msra.mxu0 0.0
        %307 = vmatprep.subr.mxu0 0.0
        %308 = vmatpush1.msra.mxu0 0.0
        %309 = vmatprep.subr.mxu0 0.0
        %310 = vmatpush1.msra.mxu0 0.0
        %311 = vmatprep.subr.mxu0 0.0
        %312 = vmatpush1.msra.mxu0 0.0
        %313 = vmatprep.subr.mxu0 0.0
        %314 = vmatpush1.msra.mxu0 0.0
        %315 = vmatprep.mubr.f32.mxu0 0.0
        %316 = vmatmul.mubr.f32.gmra.mrb[0].mxu0 %v249
        %v317 = vpop.f32.mrb[0].mxu0
        %v318 = vadd.f32 0.0, %v317
        %v319 = vpop.f32.mrb[0].mxu0
        %320 = vdwg.mxu0
        %v321 = vadd.f32 %v246, %v318
        %v322 = vxor.u32 %v321, 2147483648
        %v323 = vmul.f32 %v322, 1.442695
        %v324 = vpow.pop %v323
        %v325 = vadd.f32 %v324, 1.0
        %v326 = vrcp.pop %v325
        %v327 = vmul.f32 1.0, %v326
        %v329 = vlaneseq
        %v330 = vshrl.u32 %v329, 7
        %v331 = vsub.s32 0, %v330
        %v332 = vrot.slane %v240, %v331
        %333 = vrot.lane.b32.xlu0 %v332, 64
        %v334 = vpop.permute.xlu0 %333
        %v336 = vadd.f32 %v318, %v334
        %338 = vrot.lane.b32.xlu0 %v336, 64
        %v339 = vpop.permute.xlu0 %338
        %v341 = vmul.f32 %v327, %v339
        %343 = vrot.lane.b32.xlu0 %v341, 64
        %v344 = vpop.permute.xlu0 %343
        %v346 = vadd.f32 %v246, %v344
        %v347 = vtanh.pop %v346
        %v348 = vsub.f32 1.0, %v327
        %350 = vrot.lane.b32.xlu0 %v347, 96
        %v351 = vpop.permute.xlu0 %350
        %v353 = vmul.f32 %v348, %v351
        %354 = vrot.lane.b32.xlu0 %v245, 32
        %v355 = vpop.permute.xlu0 %354
        %v357 = vmul.f32 %v327, %v355
        %v358 = vadd.f32 %v353, %v357
        %360 = vrot.lane.b32.xlu0 %v358, 96
        %v361 = vpop.permute.xlu0 %360
        %vm363 = vcmask 254976
        %364 = vst.msk [vmem:[%s230] sm:$0x3] %vm363, %v361
        %s365 = scalar_lea.vmem %s202, 2 [#allocation3]
        %v366 = vld [vmem:[%s365] sm:$0x3]
        %v367 = vsel %vm247, %v361, 0
        %369 = vmatprep.subr.mxu0 0.0
        %370 = vmatpush1.msra.mxu0 %v241
        %371 = vmatprep.subr.mxu0 0.0
        %372 = vmatpush1.msra.mxu0 %v242
        %373 = vmatprep.subr.mxu0 0.0
        %374 = vmatpush1.msra.mxu0 %v243
        %375 = vmatprep.subr.mxu0 0.0
        %376 = vmatpush1.msra.mxu0 %v244
        %377 = vmatprep.subr.mxu0 0.0
        %378 = vmatpush1.msra.mxu0 0.0
        %379 = vmatprep.subr.mxu0 0.0
        %380 = vmatpush1.msra.mxu0 0.0
        %381 = vmatprep.subr.mxu0 0.0
        %382 = vmatpush1.msra.mxu0 0.0
        %383 = vmatprep.subr.mxu0 0.0
        %384 = vmatpush1.msra.mxu0 0.0
        %385 = vmatprep.subr.mxu0 0.0
        %386 = vmatpush1.msra.mxu0 0.0
        %387 = vmatprep.subr.mxu0 0.0
        %388 = vmatpush1.msra.mxu0 0.0
        %389 = vmatprep.subr.mxu0 0.0
        %390 = vmatpush1.msra.mxu0 0.0
        %391 = vmatprep.subr.mxu0 0.0
        %392 = vmatpush1.msra.mxu0 0.0
        %393 = vmatprep.subr.mxu0 0.0
        %394 = vmatpush1.msra.mxu0 0.0
        %395 = vmatprep.subr.mxu0 0.0
        %396 = vmatpush1.msra.mxu0 0.0
        %397 = vmatprep.subr.mxu0 0.0
        %398 = vmatpush1.msra.mxu0 0.0
        %399 = vmatprep.subr.mxu0 0.0
        %400 = vmatpush1.msra.mxu0 0.0
        %401 = vmatprep.subr.mxu0 0.0
        %402 = vmatpush1.msra.mxu0 0.0
        %403 = vmatprep.subr.mxu0 0.0
        %404 = vmatpush1.msra.mxu0 0.0
        %405 = vmatprep.subr.mxu0 0.0
        %406 = vmatpush1.msra.mxu0 0.0
        %407 = vmatprep.subr.mxu0 0.0
        %408 = vmatpush1.msra.mxu0 0.0
        %409 = vmatprep.subr.mxu0 0.0
        %410 = vmatpush1.msra.mxu0 0.0
        %411 = vmatprep.subr.mxu0 0.0
        %412 = vmatpush1.msra.mxu0 0.0
        %413 = vmatprep.subr.mxu0 0.0
        %414 = vmatpush1.msra.mxu0 0.0
        %415 = vmatprep.subr.mxu0 0.0
        %416 = vmatpush1.msra.mxu0 0.0
        %417 = vmatprep.subr.mxu0 0.0
        %418 = vmatpush1.msra.mxu0 0.0
        %419 = vmatprep.subr.mxu0 0.0
        %420 = vmatpush1.msra.mxu0 0.0
        %421 = vmatprep.subr.mxu0 0.0
        %422 = vmatpush1.msra.mxu0 0.0
        %423 = vmatprep.subr.mxu0 0.0
        %424 = vmatpush1.msra.mxu0 0.0
        %425 = vmatprep.subr.mxu0 0.0
        %426 = vmatpush1.msra.mxu0 0.0
        %427 = vmatprep.subr.mxu0 0.0
        %428 = vmatpush1.msra.mxu0 0.0
        %429 = vmatprep.subr.mxu0 0.0
        %430 = vmatpush1.msra.mxu0 0.0
        %431 = vmatprep.subr.mxu0 0.0
        %432 = vmatpush1.msra.mxu0 0.0
        %433 = vmatprep.mubr.f32.mxu0 0.0
        %434 = vmatmul.mubr.f32.gmra.mrb[0].mxu0 %v367
        %v435 = vpop.f32.mrb[0].mxu0
        %v436 = vadd.f32 0.0, %v435
        %v437 = vpop.f32.mrb[0].mxu0
        %438 = vdwg.mxu0
        %v439 = vadd.f32 %v366, %v436
        %v440 = vxor.u32 %v439, 2147483648
        %v441 = vmul.f32 %v440, 1.442695
        %v442 = vpow.pop %v441
        %v443 = vadd.f32 %v442, 1.0
        %v444 = vrcp.pop %v443
        %v445 = vmul.f32 1.0, %v444
        %v446 = vadd.f32 %v436, %v334
        %448 = vrot.lane.b32.xlu0 %v446, 64
        %v449 = vpop.permute.xlu0 %448
        %v451 = vmul.f32 %v445, %v449
        %453 = vrot.lane.b32.xlu0 %v451, 64
        %v454 = vpop.permute.xlu0 %453
        %v456 = vadd.f32 %v366, %v454
        %v457 = vtanh.pop %v456
        %v458 = vsub.f32 1.0, %v445
        %460 = vrot.lane.b32.xlu0 %v457, 96
        %v461 = vpop.permute.xlu0 %460
        %v463 = vmul.f32 %v458, %v461
        %v464 = vmul.f32 %v445, %v358
        %v465 = vadd.f32 %v463, %v464
        %467 = vrot.lane.b32.xlu0 %v465, 96
        %v468 = vpop.permute.xlu0 %467
        %s470 = scalar_lea.vmem %s230, 2 [#allocation8]
        %471 = vst.msk [vmem:[%s470] sm:$0x3] %vm363, %v468
        %s472 = scalar_lea.vmem %s202, 4 [#allocation3]
        %v473 = vld [vmem:[%s472] sm:$0x3]
        %v474 = vsel %vm247, %v468, 0
        %476 = vmatprep.subr.mxu0 0.0
        %477 = vmatpush1.msra.mxu0 %v241
        %478 = vmatprep.subr.mxu0 0.0
        %479 = vmatpush1.msra.mxu0 %v242
        %480 = vmatprep.subr.mxu0 0.0
        %481 = vmatpush1.msra.mxu0 %v243
        %482 = vmatprep.subr.mxu0 0.0
        %483 = vmatpush1.msra.mxu0 %v244
        %484 = vmatprep.subr.mxu0 0.0
        %485 = vmatpush1.msra.mxu0 0.0
        %486 = vmatprep.subr.mxu0 0.0
        %487 = vmatpush1.msra.mxu0 0.0
        %488 = vmatprep.subr.mxu0 0.0
        %489 = vmatpush1.msra.mxu0 0.0
        %490 = vmatprep.subr.mxu0 0.0
        %491 = vmatpush1.msra.mxu0 0.0
        %492 = vmatprep.subr.mxu0 0.0
        %493 = vmatpush1.msra.mxu0 0.0
        %494 = vmatprep.subr.mxu0 0.0
        %495 = vmatpush1.msra.mxu0 0.0
        %496 = vmatprep.subr.mxu0 0.0
        %497 = vmatpush1.msra.mxu0 0.0
        %498 = vmatprep.subr.mxu0 0.0
        %499 = vmatpush1.msra.mxu0 0.0
        %500 = vmatprep.subr.mxu0 0.0
        %501 = vmatpush1.msra.mxu0 0.0
        %502 = vmatprep.subr.mxu0 0.0
        %503 = vmatpush1.msra.mxu0 0.0
        %504 = vmatprep.subr.mxu0 0.0
        %505 = vmatpush1.msra.mxu0 0.0
        %506 = vmatprep.subr.mxu0 0.0
        %507 = vmatpush1.msra.mxu0 0.0
        %508 = vmatprep.subr.mxu0 0.0
        %509 = vmatpush1.msra.mxu0 0.0
        %510 = vmatprep.subr.mxu0 0.0
        %511 = vmatpush1.msra.mxu0 0.0
        %512 = vmatprep.subr.mxu0 0.0
        %513 = vmatpush1.msra.mxu0 0.0
        %514 = vmatprep.subr.mxu0 0.0
        %515 = vmatpush1.msra.mxu0 0.0
        %516 = vmatprep.subr.mxu0 0.0
        %517 = vmatpush1.msra.mxu0 0.0
        %518 = vmatprep.subr.mxu0 0.0
        %519 = vmatpush1.msra.mxu0 0.0
        %520 = vmatprep.subr.mxu0 0.0
        %521 = vmatpush1.msra.mxu0 0.0
        %522 = vmatprep.subr.mxu0 0.0
        %523 = vmatpush1.msra.mxu0 0.0
        %524 = vmatprep.subr.mxu0 0.0
        %525 = vmatpush1.msra.mxu0 0.0
        %526 = vmatprep.subr.mxu0 0.0
        %527 = vmatpush1.msra.mxu0 0.0
        %528 = vmatprep.subr.mxu0 0.0
        %529 = vmatpush1.msra.mxu0 0.0
        %530 = vmatprep.subr.mxu0 0.0
        %531 = vmatpush1.msra.mxu0 0.0
        %532 = vmatprep.subr.mxu0 0.0
        %533 = vmatpush1.msra.mxu0 0.0
        %534 = vmatprep.subr.mxu0 0.0
        %535 = vmatpush1.msra.mxu0 0.0
        %536 = vmatprep.subr.mxu0 0.0
        %537 = vmatpush1.msra.mxu0 0.0
        %538 = vmatprep.subr.mxu0 0.0
        %539 = vmatpush1.msra.mxu0 0.0
        %540 = vmatprep.mubr.f32.mxu0 0.0
        %541 = vmatmul.mubr.f32.gmra.mrb[0].mxu0 %v474
        %v542 = vpop.f32.mrb[0].mxu0
        %v543 = vadd.f32 0.0, %v542
        %v544 = vpop.f32.mrb[0].mxu0
        %545 = vdwg.mxu0
        %v546 = vadd.f32 %v473, %v543
        %v547 = vxor.u32 %v546, 2147483648
        %v548 = vmul.f32 %v547, 1.442695
        %v549 = vpow.pop %v548
        %v550 = vadd.f32 %v549, 1.0
        %v551 = vrcp.pop %v550
        %v552 = vmul.f32 1.0, %v551
        %v553 = vadd.f32 %v543, %v334
        %555 = vrot.lane.b32.xlu0 %v553, 64
        %v556 = vpop.permute.xlu0 %555
        %v558 = vmul.f32 %v552, %v556
        %560 = vrot.lane.b32.xlu0 %v558, 64
        %v561 = vpop.permute.xlu0 %560
        %v563 = vadd.f32 %v473, %v561
        %v564 = vtanh.pop %v563
        %v565 = vsub.f32 1.0, %v552
        %567 = vrot.lane.b32.xlu0 %v564, 96
        %v568 = vpop.permute.xlu0 %567
        %v570 = vmul.f32 %v565, %v568
        %v571 = vmul.f32 %v552, %v465
        %v572 = vadd.f32 %v570, %v571
        %574 = vrot.lane.b32.xlu0 %v572, 96
        %v575 = vpop.permute.xlu0 %574
        %s577 = scalar_lea.vmem %s230, 4 [#allocation8]
        %578 = vst.msk [vmem:[%s577] sm:$0x3] %vm363, %v575
        %s579 = scalar_lea.vmem %s202, 6 [#allocation3]
        %v580 = vld [vmem:[%s579] sm:$0x3]
        %v581 = vsel %vm247, %v575, 0
        %583 = vmatprep.subr.mxu0 0.0
        %584 = vmatpush1.msra.mxu0 %v241
        %585 = vmatprep.subr.mxu0 0.0
        %586 = vmatpush1.msra.mxu0 %v242
        %587 = vmatprep.subr.mxu0 0.0
        %588 = vmatpush1.msra.mxu0 %v243
        %589 = vmatprep.subr.mxu0 0.0
        %590 = vmatpush1.msra.mxu0 %v244
        %591 = vmatprep.subr.mxu0 0.0
        %592 = vmatpush1.msra.mxu0 0.0
        %593 = vmatprep.subr.mxu0 0.0
        %594 = vmatpush1.msra.mxu0 0.0
        %595 = vmatprep.subr.mxu0 0.0
        %596 = vmatpush1.msra.mxu0 0.0
        %597 = vmatprep.subr.mxu0 0.0
        %598 = vmatpush1.msra.mxu0 0.0
        %599 = vmatprep.subr.mxu0 0.0
        %600 = vmatpush1.msra.mxu0 0.0
        %601 = vmatprep.subr.mxu0 0.0
        %602 = vmatpush1.msra.mxu0 0.0
        %603 = vmatprep.subr.mxu0 0.0
        %604 = vmatpush1.msra.mxu0 0.0
        %605 = vmatprep.subr.mxu0 0.0
        %606 = vmatpush1.msra.mxu0 0.0
        %607 = vmatprep.subr.mxu0 0.0
        %608 = vmatpush1.msra.mxu0 0.0
        %609 = vmatprep.subr.mxu0 0.0
        %610 = vmatpush1.msra.mxu0 0.0
        %611 = vmatprep.subr.mxu0 0.0
        %612 = vmatpush1.msra.mxu0 0.0
        %613 = vmatprep.subr.mxu0 0.0
        %614 = vmatpush1.msra.mxu0 0.0
        %615 = vmatprep.subr.mxu0 0.0
        %616 = vmatpush1.msra.mxu0 0.0
        %617 = vmatprep.subr.mxu0 0.0
        %618 = vmatpush1.msra.mxu0 0.0
        %619 = vmatprep.subr.mxu0 0.0
        %620 = vmatpush1.msra.mxu0 0.0
        %621 = vmatprep.subr.mxu0 0.0
        %622 = vmatpush1.msra.mxu0 0.0
        %623 = vmatprep.subr.mxu0 0.0
        %624 = vmatpush1.msra.mxu0 0.0
        %625 = vmatprep.subr.mxu0 0.0
        %626 = vmatpush1.msra.mxu0 0.0
        %627 = vmatprep.subr.mxu0 0.0
        %628 = vmatpush1.msra.mxu0 0.0
        %629 = vmatprep.subr.mxu0 0.0
        %630 = vmatpush1.msra.mxu0 0.0
        %631 = vmatprep.subr.mxu0 0.0
        %632 = vmatpush1.msra.mxu0 0.0
        %633 = vmatprep.subr.mxu0 0.0
        %634 = vmatpush1.msra.mxu0 0.0
        %635 = vmatprep.subr.mxu0 0.0
        %636 = vmatpush1.msra.mxu0 0.0
        %637 = vmatprep.subr.mxu0 0.0
        %638 = vmatpush1.msra.mxu0 0.0
        %639 = vmatprep.subr.mxu0 0.0
        %640 = vmatpush1.msra.mxu0 0.0
        %641 = vmatprep.subr.mxu0 0.0
        %642 = vmatpush1.msra.mxu0 0.0
        %643 = vmatprep.subr.mxu0 0.0
        %644 = vmatpush1.msra.mxu0 0.0
        %645 = vmatprep.subr.mxu0 0.0
        %646 = vmatpush1.msra.mxu0 0.0
        %647 = vmatprep.mubr.f32.mxu0 0.0
        %648 = vmatmul.mubr.f32.gmra.mrb[0].mxu0 %v581
        %v649 = vpop.f32.mrb[0].mxu0
        %v650 = vadd.f32 0.0, %v649
        %v651 = vpop.f32.mrb[0].mxu0
        %652 = vdwg.mxu0
        %v653 = vadd.f32 %v580, %v650
        %v654 = vxor.u32 %v653, 2147483648
        %v655 = vmul.f32 %v654, 1.442695
        %v656 = vpow.pop %v655
        %v657 = vadd.f32 %v656, 1.0
        %v658 = vrcp.pop %v657
        %v659 = vmul.f32 1.0, %v658
        %v660 = vadd.f32 %v650, %v334
        %662 = vrot.lane.b32.xlu0 %v660, 64
        %v663 = vpop.permute.xlu0 %662
        %v665 = vmul.f32 %v659, %v663
        %667 = vrot.lane.b32.xlu0 %v665, 64
        %v668 = vpop.permute.xlu0 %667
        %v670 = vadd.f32 %v580, %v668
        %v671 = vtanh.pop %v670
        %v672 = vsub.f32 1.0, %v659
        %674 = vrot.lane.b32.xlu0 %v671, 96
        %v675 = vpop.permute.xlu0 %674
        %v677 = vmul.f32 %v672, %v675
        %v678 = vmul.f32 %v659, %v572
        %v679 = vadd.f32 %v677, %v678
        %681 = vrot.lane.b32.xlu0 %v679, 96
        %v682 = vpop.permute.xlu0 %681
        %s684 = scalar_lea.vmem %s230, 6 [#allocation8]
        %685 = vst.msk [vmem:[%s684] sm:$0x3] %vm363, %v682
        %686 = vst.msk [vmem:[#allocation2] sm:$0x3] %vm363, %v682
        %s687 = sand.u32 %s119, 1
        %s688 = scalar_lea.sflag [#allocation5], %s687
        %s689 = sand.u32 %s119, 1
        %s690 = smul.addr %s689, 8
        %s691 = scalar_lea.vmem [#allocation8], %s690
        // Predicated region
        $region49: #{tpu_custom_call.1} parent=35 // pred_check
          %p692 = pneg %p129
        $region50: #{tpu_custom_call.1} parent=35 // pred_check_branch
          %694 = sbr.rel (%p692) target = $region52
        $region51: #{tpu_custom_call.1} parent=35 // pred_region
          %s695 = smul.u32 4, %s22
          %s697 = ssub.s32 128, 128
          %698 = vsyncadd %s688, %s697
          %s699 = smul.addr %s695, 32
          %s700 = scalar_lea.hbm %s4, %s699
          %s701 = sshll.u32 %s691, 4
          %s702 = int_to_ptr.vmem [resolvable:$true] %s701
          %707 = dma.vmem_to_hbm [thread:$0]  %s702, 128, %s700, %s688, 32, 32, 2
        $region52: #{tpu_custom_call.1} parent=35 // pred_fallthru
          _
      $region36: #{tpu_custom_call.1} parent=5 // pred_fallthru
        _
      %p708 = scmp.le.s32.totalorder 2, %s17
      // Predicated region
      $region53: #{tpu_custom_call.1} parent=5 // pred_check
        %p709 = pneg %p708
      $region54: #{tpu_custom_call.1} parent=5 // pred_check_branch
        %711 = sbr.rel (%p709) target = $region56
      $region55: #{tpu_custom_call.1} parent=5 // pred_region
        %s712 = ssub.s32 %s17, 2
        // Predicated region
        $region57: #{tpu_custom_call.1} parent=55 // pred_check
          %p713 = pneg %p135
        $region58: #{tpu_custom_call.1} parent=55 // pred_check_branch
          %715 = sbr.rel (%p713) target = $region60
        $region59: #{tpu_custom_call.1} parent=55 // pred_region
          %s716 = sand.u32 %s120, 1
          %s717 = scalar_lea.sflag [#allocation5], %s716
          %s718 = sand.u32 %s120, 1
          %s719 = smul.addr %s718, 8
          %s720 = scalar_lea.vmem [#allocation8], %s719
          %721 = dma.done %s717, 128
        $region60: #{tpu_custom_call.1} parent=55 // pred_fallthru
          _
      $region56: #{tpu_custom_call.1} parent=5 // pred_fallthru
        _
    $region6: #{tpu_custom_call.1} parent=1 // loop_footer
      %s21 = sadd.s32 1, %s17
    $region7: #{tpu_custom_call.1} parent=1 // loop_footer_branch
      %16 = sbr.rel target = $region3
    $region8: #{tpu_custom_call.1} parent=1 // loop_exit
      _
    %722 = vsyncpa [#allocation4], 1
    %s723 = scalar_lea.sflag [#allocation4], 1
    %724 = vsyncpa %s723, 1
    %725 = vsyncpa [#allocation7], 1
    %726 = vsyncpa [#allocation5], 1
    %s727 = scalar_lea.sflag [#allocation5], 1
    %728 = vsyncpa %s727, 1

</llo_original>
